<compile_context>
chip_gen: v5e
topology: v5e:2x2
jax: 0.10.0
libtpu: 0.0.40
codegen_flags: <defaults>
</compile_context>

<pallas_src>
import jax
import jax.numpy as jnp
from jax.experimental import pallas as pl
from jax.experimental.pallas import tpu as pltpu

# ----------------------------- model config ---------------------------------
N = 2            # batch
T = 12           # BERT (word-piece) sequence length
L = 8            # word-level sequence length (word_indexer / dep_tags length)
D = 32           # bert hidden size == config.embedding_dim
ATT_HID = 64     # AttentionBasedRelation hidden_dim (default 64)
NUM_HEADS = 2    # config.num_heads
NUM_HIGHWAY = 2  # config.num_layers (highway depth)
NUM_MLPS = 2     # config.num_mlps
FINAL_HID = 32   # config.final_hidden_size
NUM_CLASSES = 3  # config.num_classes
VOCAB = 30
DEP_TAG_COUNT = 10

FP = jnp.float32
NL = N * L
LANES = 128
OUT_ROWS = 8          # sublane/lane-dense output tile; logits live in [:N, :NUM_CLASSES]
ACT_ROWS = NL + OUT_ROWS  # activation slab rows (feat/dep/mask rows + padded cls rows)

# ------------------- weight-slab row layout (one [W_ROWS, 128] slab) --------
R_HW    = 0                                   # per layer i: rows [R_HW+i*D, +D), lanes [gate|lin] 0:2D
R_AW1   = R_HW + NUM_HIGHWAY * D              # [D, H*ATT_HID]           lanes 0:H*ATT_HID
R_AW2   = R_AW1 + D                           # [H*ATT_HID, 128]         block-diag fc2 in cols 0:H
R_POOL  = R_AW2 + NUM_HEADS * ATT_HID         # [D, D]                   lanes 0:D
R_W0    = R_POOL + D                          # [2D, FINAL_HID]          (rows 0:D dep half, D:2D pool half)
R_WH    = R_W0 + 2 * D                        # (NUM_MLPS-1) blocks of [FINAL_HID, FINAL_HID]
R_WO    = R_WH + (NUM_MLPS - 1) * FINAL_HID   # [FINAL_HID, 128]         out_w in cols 0:NUM_CLASSES
R_BIND  = R_WO + FINAL_HID                    # [OUT_ROWS, NL]   batch indicator (row n = tokens of batch n)
R_BINDT = R_BIND + OUT_ROWS                   # [NL, OUT_ROWS]   its transpose
R_BIAS  = R_BINDT + NL                        # bias block, one row per bias
# bias rows (relative to R_BIAS)
BI_HW   = 0                                   # NUM_HIGHWAY rows: lanes [gate_b | lin_b]
BI_AB1  = BI_HW + NUM_HIGHWAY
BI_AB2  = BI_AB1 + 1
BI_POOL = BI_AB2 + 1
BI_B0   = BI_POOL + 1
BI_BH   = BI_B0 + 1                           # NUM_MLPS-1 rows
BI_BO   = BI_BH + (NUM_MLPS - 1)
N_BIAS  = BI_BO + 1
W_ROWS  = ((R_BIAS + N_BIAS + 7) // 8) * 8
BIAS_BLOCK = W_ROWS - R_BIAS

assert NUM_HEADS * ATT_HID <= LANES and 2 * D <= LANES and FINAL_HID <= LANES


# ----------------------------- fused Pallas kernel --------------------------
def fused_kernel(act_ref, w_ref, o_ref):
    """Fused forward pass on two packed VMEM slabs.

    act : [ACT_ROWS, 128]  rows 0:NL -> [feat(0:D) | dep(D:2D) | mask(2D)]
                           rows NL:NL+8 -> cls in lanes 0:D (rows >= N zero)
    w   : [W_ROWS, 128]    packed weights/biases/indicators (layout above)
    out : [8, 128]         logits in [:N, :NUM_CLASSES]
    """
    # ---- unpack activation slab (one lane-dense load, value slices after) ----
    a0 = act_ref[0:NL, :]                                   # [N*L, 128]
    feat = a0[:, 0:D]                                       # [N*L, D]
    dep = a0[:, D:2 * D]                                    # [N*L, D]
    mask = a0[:, 2 * D:2 * D + 1]                           # [N*L, 1]
    cls8 = act_ref[NL:NL + OUT_ROWS, 0:D]                   # [8, D]

    biases = w_ref[R_BIAS:R_BIAS + BIAS_BLOCK, :]           # [8, 128]

    # ---- dependency highway: gate+linear fused into one matmul per layer ----
    x = dep
    for i in range(NUM_HIGHWAY):
        wi = w_ref[R_HW + i * D:R_HW + (i + 1) * D, 0:2 * D]        # [D, 2D]
        bi = biases[BI_HW + i:BI_HW + i + 1, 0:2 * D]               # [1, 2D]
        z = jnp.dot(x, wi, preferred_element_type=FP) + bi
        gate = jax.nn.sigmoid(z[:, 0:D])
        nonlin = jnp.maximum(z[:, D:2 * D], 0.0)
        x = gate * nonlin + (1.0 - gate) * x                        # [N*L, D]

    # ---- AttentionBasedRelation: all heads in one 128-lane matmul ----
    aw1 = w_ref[R_AW1:R_AW1 + D, :]                                 # [D, H*HID]
    ab1 = biases[BI_AB1:BI_AB1 + 1, :]
    hdn = jnp.maximum(jnp.dot(x, aw1, preferred_element_type=FP) + ab1, 0.0)
    aw2 = w_ref[R_AW2:R_AW2 + NUM_HEADS * ATT_HID, :]               # block-diag fc2
    ab2 = biases[BI_AB2:BI_AB2 + 1, 0:NUM_HEADS]
    s = jnp.dot(hdn, aw2, preferred_element_type=FP)[:, 0:NUM_HEADS] + ab2   # [N*L, H]

    # apply_masked_logits + per-batch softmax over L (vectorized, no Python loop)
    s = s * mask + (1.0 - mask) * (-1e30)
    s = s - jnp.max(s, axis=0, keepdims=True)       # per-head constant shift (valid for softmax)
    e = jnp.exp(s)                                  # masked rows -> exactly 0
    bind = w_ref[R_BIND:R_BIND + OUT_ROWS, 0:NL]    # [8, N*L]  batch indicators
    bindT = w_ref[R_BINDT:R_BINDT + NL, 0:OUT_ROWS]  # [N*L, 8]
    denom = jnp.dot(bind, e, preferred_element_type=FP)            # per-batch sums   [8, H]
    denom = jnp.dot(bindT, denom, preferred_element_type=FP)       # scattered back   [N*L, H]
    p = e * pl.reciprocal(denom, approx=True)                      # softmax weights
    pw = jnp.sum(p, axis=1, keepdims=True) * (1.0 / NUM_HEADS)     # mean over heads  [N*L, 1]
    dep_out = jnp.dot(bind, feat * pw, preferred_element_type=FP)  # weighted pooling [8, D]

    # ---- BERT pooler: tanh(cls @ W + b) ----
    pool_w = w_ref[R_POOL:R_POOL + D, 0:D]
    pool_b = biases[BI_POOL:BI_POOL + 1, 0:D]
    pool = jnp.tanh(jnp.dot(cls8, pool_w, preferred_element_type=FP) + pool_b)  # [8, D]

    # ---- final MLP head; concat([dep_out, pool]) folded into split weights ----
    w0d = w_ref[R_W0:R_W0 + D, 0:FINAL_HID]
    w0p = w_ref[R_W0 + D:R_W0 + 2 * D, 0:FINAL_HID]
    b0 = biases[BI_B0:BI_B0 + 1, 0:FINAL_HID]
    h = jnp.maximum(jnp.dot(dep_out, w0d, preferred_element_type=FP)
                    + jnp.dot(pool, w0p, preferred_element_type=FP) + b0, 0.0)
    for i in range(NUM_MLPS - 1):
        whi = w_ref[R_WH + i * FINAL_HID:R_WH + (i + 1) * FINAL_HID, 0:FINAL_HID]
        bhi = biases[BI_BH + i:BI_BH + i + 1, 0:FINAL_HID]
        h = jnp.maximum(jnp.dot(h, whi, preferred_element_type=FP) + bhi, 0.0)
    wo = w_ref[R_WO:R_WO + FINAL_HID, :]                            # [FINAL_HID, 128]
    bo = biases[BI_BO:BI_BO + 1, :]
    o_ref[...] = jnp.dot(h, wo, preferred_element_type=FP) + bo     # full [8,128] unmasked store


def run_fused(act, wslab):
    return pl.pallas_call(
        fused_kernel,
        out_shape=jax.ShapeDtypeStruct((OUT_ROWS, LANES), FP),
        in_specs=[pl.BlockSpec(memory_space=pltpu.MemorySpace.VMEM),
                  pl.BlockSpec(memory_space=pltpu.MemorySpace.VMEM)],
        out_specs=pl.BlockSpec(memory_space=pltpu.MemorySpace.VMEM),
    )(act, wslab)


# ----------------------------- parameters -----------------------------------
def init_params(key):
    ks = iter(jax.random.split(key, 32))
    s = 0.05
    p = {}
    # synthetic BERT stand-in (see TODO(synk) above)
    p["tok_emb"] = s * jax.random.normal(next(ks), (VOCAB, D), FP)
    p["seg_emb"] = s * jax.random.normal(next(ks), (2, D), FP)
    p["pool_w"] = s * jax.random.normal(next(ks), (D, D), FP)
    p["pool_b"] = jnp.zeros((D,), FP)
    # dependency-tag embedding
    p["dep_emb"] = s * jax.random.normal(next(ks), (DEP_TAG_COUNT, D), FP)
    # dependency highway network
    p["hw_lin_w"] = s * jax.random.normal(next(ks), (NUM_HIGHWAY, D, D), FP)
    p["hw_lin_b"] = jnp.zeros((NUM_HIGHWAY, 1, D), FP)
    p["hw_gate_w"] = s * jax.random.normal(next(ks), (NUM_HIGHWAY, D, D), FP)
    p["hw_gate_b"] = jnp.zeros((NUM_HIGHWAY, 1, D), FP)
    # attention heads (AttentionBasedRelation x NUM_HEADS)
    p["att_w1"] = s * jax.random.normal(next(ks), (NUM_HEADS, D, ATT_HID), FP)
    p["att_b1"] = jnp.zeros((NUM_HEADS, 1, ATT_HID), FP)
    p["att_w2"] = s * jax.random.normal(next(ks), (NUM_HEADS, ATT_HID, 1), FP)
    p["att_b2"] = jnp.zeros((NUM_HEADS, 1, 1), FP)
    # final MLP + output layer
    p["mlp_w0"] = s * jax.random.normal(next(ks), (2 * D, FINAL_HID), FP)
    p["mlp_b0"] = jnp.zeros((1, FINAL_HID), FP)
    p["mlp_wh"] = s * jax.random.normal(
        next(ks), (NUM_MLPS - 1, FINAL_HID, FINAL_HID), FP)
    p["mlp_bh"] = jnp.zeros((NUM_MLPS - 1, 1, FINAL_HID), FP)
    p["out_w"] = s * jax.random.normal(next(ks), (FINAL_HID, NUM_CLASSES), FP)
    p["out_b"] = jnp.zeros((1, NUM_CLASSES), FP)
    return p


def prepare_params(p):
    """One-time packing of all weights into a single lane-dense [W_ROWS, 128] slab."""
    W = jnp.zeros((W_ROWS, LANES), FP)
    # highway: per layer, [gate | lin]
    for i in range(NUM_HIGHWAY):
        W = W.at[R_HW + i * D:R_HW + (i + 1) * D, 0:D].set(p["hw_gate_w"][i])
        W = W.at[R_HW + i * D:R_HW + (i + 1) * D, D:2 * D].set(p["hw_lin_w"][i])
    # attention fc1 merged across heads
    aw1 = jnp.concatenate([p["att_w1"][h] for h in range(NUM_HEADS)], axis=1)
    W = W.at[R_AW1:R_AW1 + D, 0:NUM_HEADS * ATT_HID].set(aw1)
    # attention fc2 as exact block-diagonal matrix (cols 0:NUM_HEADS)
    for h in range(NUM_HEADS):
        W = W.at[R_AW2 + h * ATT_HID:R_AW2 + (h + 1) * ATT_HID, h:h + 1].set(p["att_w2"][h])
    # pooler / MLP / output weights
    W = W.at[R_POOL:R_POOL + D, 0:D].set(p["pool_w"])
    W = W.at[R_W0:R_W0 + 2 * D, 0:FINAL_HID].set(p["mlp_w0"])
    for i in range(NUM_MLPS - 1):
        W = W.at[R_WH + i * FINAL_HID:R_WH + (i + 1) * FINAL_HID, 0:FINAL_HID].set(p["mlp_wh"][i])
    W = W.at[R_WO:R_WO + FINAL_HID, 0:NUM_CLASSES].set(p["out_w"])
    # batch indicator matrices for segmented softmax / weighted pooling
    rows = jnp.arange(NL)
    batch = jnp.arange(OUT_ROWS)
    bind = (rows[None, :] // L == batch[:, None]).astype(FP)        # [8, NL]
    W = W.at[R_BIND:R_BIND + OUT_ROWS, 0:NL].set(bind)
    W = W.at[R_BINDT:R_BINDT + NL, 0:OUT_ROWS].set(bind.T)
    # biases (one row each)
    for i in range(NUM_HIGHWAY):
        W = W.at[R_BIAS + BI_HW + i, 0:D].set(p["hw_gate_b"][i, 0])
        W = W.at[R_BIAS + BI_HW + i, D:2 * D].set(p["hw_lin_b"][i, 0])
    ab1 = jnp.concatenate([p["att_b1"][h] for h in range(NUM_HEADS)], axis=1)
    W = W.at[R_BIAS + BI_AB1, 0:NUM_HEADS * ATT_HID].set(ab1[0])
    W = W.at[R_BIAS + BI_AB2, 0:NUM_HEADS].set(p["att_b2"][:, 0, 0])
    W = W.at[R_BIAS + BI_POOL, 0:D].set(p["pool_b"])
    W = W.at[R_BIAS + BI_B0, 0:FINAL_HID].set(p["mlp_b0"][0])
    for i in range(NUM_MLPS - 1):
        W = W.at[R_BIAS + BI_BH + i, 0:FINAL_HID].set(p["mlp_bh"][i, 0])
    W = W.at[R_BIAS + BI_BO, 0:NUM_CLASSES].set(p["out_b"][0])
    return {"wslab": W, "tok_emb": p["tok_emb"], "seg_emb": p["seg_emb"],
            "dep_emb": p["dep_emb"]}


# ----------------------------- forward pass ---------------------------------
def _forward_impl(prep, input_cat_ids, segment_ids, word_indexer, dep_tags):
    # feature_mask = (ones_like(word_indexer) != word_indexer).float(); [:,0]=1
    feature_mask = (word_indexer != 1).astype(FP)
    feature_mask = feature_mask.at[:, 0].set(1.0)                  # [N, L]

    # --- synthetic BERT encoder (tiny gathers, fused by jit) ---
    feature_output = (prep["tok_emb"][input_cat_ids]
                      + prep["seg_emb"][segment_ids])              # [N, T, D]
    cls = feature_output[:, 0, :]                                  # [N, D]
    feature = jnp.take_along_axis(
        feature_output, word_indexer[:, :, None], axis=1)          # [N, L, D]
    dep_feature = prep["dep_emb"][dep_tags]                        # [N, L, D]

    # --- pack activations into one lane-dense slab (single kernel input DMA) ---
    act = jnp.zeros((ACT_ROWS, LANES), FP)
    act = act.at[0:NL, 0:D].set(feature.reshape(NL, D))
    act = act.at[0:NL, D:2 * D].set(dep_feature.reshape(NL, D))
    act = act.at[0:NL, 2 * D:2 * D + 1].set(feature_mask.reshape(NL, 1))
    act = act.at[NL:NL + N, 0:D].set(cls)

    out = run_fused(act, prep["wslab"])                            # [8, 128]
    return out[:N, :NUM_CLASSES]


forward = jax.jit(_forward_impl)


# pure-JAX reference of the exact same math, for a sanity check
def forward_ref(params, input_cat_ids, segment_ids, word_indexer, dep_tags):
    feature_mask = (word_indexer != 1).astype(FP)
    feature_mask = feature_mask.at[:, 0].set(1.0)
    feature_output = params["tok_emb"][input_cat_ids] + params["seg_emb"][segment_ids]
    pool_output = jnp.tanh(feature_output[:, 0, :] @ params["pool_w"] + params["pool_b"])
    feature = jnp.take_along_axis(feature_output, word_indexer[:, :, None], axis=1)
    x = params["dep_emb"][dep_tags]
    for i in range(NUM_HIGHWAY):
        g = jax.nn.sigmoid(x @ params["hw_gate_w"][i] + params["hw_gate_b"][i])
        nl = jnp.maximum(x @ params["hw_lin_w"][i] + params["hw_lin_b"][i], 0.0)
        x = g * nl + (1.0 - g) * x
    dep_feature = x
    outs = []
    for h in range(NUM_HEADS):
        hdn = jnp.maximum(dep_feature @ params["att_w1"][h] + params["att_b1"][h], 0.0)
        s = (hdn @ params["att_w2"][h] + params["att_b2"][h])[..., 0]      # [N, L]
        s = s * feature_mask + (1.0 - feature_mask) * (-1e30)
        p = jax.nn.softmax(s, axis=1)
        outs.append(jnp.einsum("nld,nl->nd", feature, p))
    dep_out = jnp.mean(jnp.stack(outs, axis=1), axis=1)
    f = jnp.concatenate([dep_out, pool_output], axis=1)
    h = jnp.maximum(f @ params["mlp_w0"] + params["mlp_b0"], 0.0)
    for i in range(NUM_MLPS - 1):
        h = jnp.maximum(h @ params["mlp_wh"][i] + params["mlp_bh"][i], 0.0)
    return h @ params["out_w"] + params["out_b"]


# ----------------------------- main ------------------------------------------
if __name__ == "__main__":
    key = jax.random.PRNGKey(0)
    kp, k1, k2, k3, k4 = jax.random.split(key, 5)
    params = init_params(kp)
    prep = prepare_params(params)          # one-time weight packing (hoisted out of forward)

    input_cat_ids = jax.random.randint(k1, (N, T), 0, VOCAB, dtype=jnp.int32)
    segment_ids = jax.random.randint(k2, (N, T), 0, 2, dtype=jnp.int32)
    # word_indexer holds positions into the BERT sequence; value 1 marks padding
    word_indexer = jax.random.randint(k3, (N, L), 0, T, dtype=jnp.int32)
    word_indexer = word_indexer.at[:, 0].set(0)
    word_indexer = word_indexer.at[:, L - 1].set(1)   # some padded slots
    dep_tags = jax.random.randint(k4, (N, L), 0, DEP_TAG_COUNT, dtype=jnp.int32)

    logits = forward(prep, input_cat_ids, segment_ids, word_indexer, dep_tags)
    logits = jax.block_until_ready(logits)

    ref = forward_ref(params, input_cat_ids, segment_ids, word_indexer, dep_tags)
    assert logits.shape == (N, NUM_CLASSES)
    # slightly loosened tolerance to cover pl.reciprocal(approx=True) in the softmax
    assert jnp.allclose(logits, ref, rtol=2e-3, atol=2e-4)

    print("KERNEL_OK")
</pallas_src>

<mosaic_0001>
module attributes {stable_mosaic.version = 11 : i64} {
  func.func @fused_kernel(%arg0: memref<24x128xf32, #tpu.memory_space<vmem>>, %arg1: memref<416x128xf32, #tpu.memory_space<vmem>>, %arg2: memref<8x128xf32, #tpu.memory_space<vmem>>) attributes {dimension_semantics = [], scalar_prefetch = 0 : i64, scratch_operands = 0 : i64, tpu.core_type = #tpu.core_type<tc>} {
    %c0 = arith.constant 0 : index
    %c0_0 = arith.constant 0 : index
    %0 = vector.load %arg0[%c0, %c0_0] : memref<24x128xf32, #tpu.memory_space<vmem>>, vector<16x128xf32>
    %1 = vector.extract_strided_slice %0 {offsets = [0, 0], sizes = [16, 32], strides = [1, 1]} : vector<16x128xf32> to vector<16x32xf32>
    %2 = vector.extract_strided_slice %0 {offsets = [0, 32], sizes = [16, 32], strides = [1, 1]} : vector<16x128xf32> to vector<16x32xf32>
    %3 = vector.extract_strided_slice %0 {offsets = [0, 64], sizes = [16, 1], strides = [1, 1]} : vector<16x128xf32> to vector<16x1xf32>
    %c16 = arith.constant 16 : index
    %c0_1 = arith.constant 0 : index
    %4 = vector.load %arg0[%c16, %c0_1] : memref<24x128xf32, #tpu.memory_space<vmem>>, vector<8x32xf32>
    %c408 = arith.constant 408 : index
    %c0_2 = arith.constant 0 : index
    %5 = vector.load %arg1[%c408, %c0_2] : memref<416x128xf32, #tpu.memory_space<vmem>>, vector<8x128xf32>
    %c0_3 = arith.constant 0 : index
    %c0_4 = arith.constant 0 : index
    %6 = vector.load %arg1[%c0_3, %c0_4] : memref<416x128xf32, #tpu.memory_space<vmem>>, vector<32x64xf32>
    %7 = vector.extract_strided_slice %5 {offsets = [0, 0], sizes = [1, 64], strides = [1, 1]} : vector<8x128xf32> to vector<1x64xf32>
    %cst = arith.constant dense<0.000000e+00> : vector<16x64xf32>
    %8 = tpu.matmul %2, %6, %cst {dimension_numbers = #tpu.dot_dimension_numbers<[1], [0], [0], [1], [0, 0, 1, 1], [], []>} : vector<16x32xf32>, vector<32x64xf32>, vector<16x64xf32> -> vector<16x64xf32>
    %9 = vector.broadcast %7 : vector<1x64xf32> to vector<16x64xf32>
    %10 = arith.addf %8, %9 : vector<16x64xf32>
    %11 = vector.extract_strided_slice %10 {offsets = [0, 0], sizes = [16, 32], strides = [1, 1]} : vector<16x64xf32> to vector<16x32xf32>
    %12 = arith.negf %11 : vector<16x32xf32>
    %13 = math.exp %12 : vector<16x32xf32>
    %cst_5 = arith.constant 1.000000e+00 : f32
    %14 = vector.broadcast %cst_5 : f32 to vector<16x32xf32>
    %15 = arith.addf %14, %13 : vector<16x32xf32>
    %16 = arith.divf %14, %15 : vector<16x32xf32>
    %17 = vector.extract_strided_slice %10 {offsets = [0, 32], sizes = [16, 32], strides = [1, 1]} : vector<16x64xf32> to vector<16x32xf32>
    %cst_6 = arith.constant 0.000000e+00 : f32
    %18 = vector.broadcast %cst_6 : f32 to vector<16x32xf32>
    %19 = arith.maximumf %17, %18 : vector<16x32xf32>
    %20 = arith.mulf %16, %19 : vector<16x32xf32>
    %cst_7 = arith.constant 1.000000e+00 : f32
    %21 = vector.broadcast %cst_7 : f32 to vector<16x32xf32>
    %22 = arith.subf %21, %16 : vector<16x32xf32>
    %23 = arith.mulf %22, %2 : vector<16x32xf32>
    %24 = arith.addf %20, %23 : vector<16x32xf32>
    %c32 = arith.constant 32 : index
    %c0_8 = arith.constant 0 : index
    %25 = vector.load %arg1[%c32, %c0_8] : memref<416x128xf32, #tpu.memory_space<vmem>>, vector<32x64xf32>
    %26 = vector.extract_strided_slice %5 {offsets = [1, 0], sizes = [1, 64], strides = [1, 1]} : vector<8x128xf32> to vector<1x64xf32>
    %cst_9 = arith.constant dense<0.000000e+00> : vector<16x64xf32>
    %27 = tpu.matmul %24, %25, %cst_9 {dimension_numbers = #tpu.dot_dimension_numbers<[1], [0], [0], [1], [0, 0, 1, 1], [], []>} : vector<16x32xf32>, vector<32x64xf32>, vector<16x64xf32> -> vector<16x64xf32>
    %28 = vector.broadcast %26 : vector<1x64xf32> to vector<16x64xf32>
    %29 = arith.addf %27, %28 : vector<16x64xf32>
    %30 = vector.extract_strided_slice %29 {offsets = [0, 0], sizes = [16, 32], strides = [1, 1]} : vector<16x64xf32> to vector<16x32xf32>
    %31 = arith.negf %30 : vector<16x32xf32>
    %32 = math.exp %31 : vector<16x32xf32>
    %cst_10 = arith.constant 1.000000e+00 : f32
    %33 = vector.broadcast %cst_10 : f32 to vector<16x32xf32>
    %34 = arith.addf %33, %32 : vector<16x32xf32>
    %35 = arith.divf %33, %34 : vector<16x32xf32>
    %36 = vector.extract_strided_slice %29 {offsets = [0, 32], sizes = [16, 32], strides = [1, 1]} : vector<16x64xf32> to vector<16x32xf32>
    %cst_11 = arith.constant 0.000000e+00 : f32
    %37 = vector.broadcast %cst_11 : f32 to vector<16x32xf32>
    %38 = arith.maximumf %36, %37 : vector<16x32xf32>
    %39 = arith.mulf %35, %38 : vector<16x32xf32>
    %cst_12 = arith.constant 1.000000e+00 : f32
    %40 = vector.broadcast %cst_12 : f32 to vector<16x32xf32>
    %41 = arith.subf %40, %35 : vector<16x32xf32>
    %42 = arith.mulf %41, %24 : vector<16x32xf32>
    %43 = arith.addf %39, %42 : vector<16x32xf32>
    %c64 = arith.constant 64 : index
    %c0_13 = arith.constant 0 : index
    %44 = vector.load %arg1[%c64, %c0_13] : memref<416x128xf32, #tpu.memory_space<vmem>>, vector<32x128xf32>
    %45 = vector.extract_strided_slice %5 {offsets = [2, 0], sizes = [1, 128], strides = [1, 1]} : vector<8x128xf32> to vector<1x128xf32>
    %cst_14 = arith.constant dense<0.000000e+00> : vector<16x128xf32>
    %46 = tpu.matmul %43, %44, %cst_14 {dimension_numbers = #tpu.dot_dimension_numbers<[1], [0], [0], [1], [0, 0, 1, 1], [], []>} : vector<16x32xf32>, vector<32x128xf32>, vector<16x128xf32> -> vector<16x128xf32>
    %47 = vector.broadcast %45 : vector<1x128xf32> to vector<16x128xf32>
    %48 = arith.addf %46, %47 : vector<16x128xf32>
    %cst_15 = arith.constant 0.000000e+00 : f32
    %49 = vector.broadcast %cst_15 : f32 to vector<16x128xf32>
    %50 = arith.maximumf %48, %49 : vector<16x128xf32>
    %c96 = arith.constant 96 : index
    %c0_16 = arith.constant 0 : index
    %51 = vector.load %arg1[%c96, %c0_16] : memref<416x128xf32, #tpu.memory_space<vmem>>, vector<128x128xf32>
    %52 = vector.extract_strided_slice %5 {offsets = [3, 0], sizes = [1, 2], strides = [1, 1]} : vector<8x128xf32> to vector<1x2xf32>
    %cst_17 = arith.constant dense<0.000000e+00> : vector<16x128xf32>
    %53 = tpu.matmul %50, %51, %cst_17 {dimension_numbers = #tpu.dot_dimension_numbers<[1], [0], [0], [1], [0, 0, 1, 1], [], []>} : vector<16x128xf32>, vector<128x128xf32>, vector<16x128xf32> -> vector<16x128xf32>
    %54 = vector.extract_strided_slice %53 {offsets = [0, 0], sizes = [16, 2], strides = [1, 1]} : vector<16x128xf32> to vector<16x2xf32>
    %55 = vector.broadcast %52 : vector<1x2xf32> to vector<16x2xf32>
    %56 = arith.addf %54, %55 : vector<16x2xf32>
    %57 = vector.broadcast %3 : vector<16x1xf32> to vector<16x2xf32>
    %58 = arith.mulf %56, %57 : vector<16x2xf32>
    %cst_18 = arith.constant 1.000000e+00 : f32
    %59 = vector.broadcast %cst_18 : f32 to vector<16x1xf32>
    %60 = arith.subf %59, %3 : vector<16x1xf32>
    %cst_19 = arith.constant -1.000000e+30 : f32
    %61 = vector.broadcast %cst_19 : f32 to vector<16x1xf32>
    %62 = arith.mulf %60, %61 : vector<16x1xf32>
    %63 = vector.broadcast %62 : vector<16x1xf32> to vector<16x2xf32>
    %64 = arith.addf %58, %63 : vector<16x2xf32>
    %cst_20 = arith.constant dense<0xFF800000> : vector<2xf32>
    %65 = vector.multi_reduction <maximumf>, %64, %cst_20 [0] : vector<16x2xf32> to vector<2xf32>
    %66 = vector.shape_cast %65 : vector<2xf32> to vector<1x2xf32>
    %67 = vector.broadcast %66 : vector<1x2xf32> to vector<16x2xf32>
    %68 = arith.subf %64, %67 : vector<16x2xf32>
    %69 = math.exp %68 : vector<16x2xf32>
    %c384 = arith.constant 384 : index
    %c0_21 = arith.constant 0 : index
    %70 = vector.load %arg1[%c384, %c0_21] : memref<416x128xf32, #tpu.memory_space<vmem>>, vector<8x16xf32>
    %c392 = arith.constant 392 : index
    %c0_22 = arith.constant 0 : index
    %71 = vector.load %arg1[%c392, %c0_22] : memref<416x128xf32, #tpu.memory_space<vmem>>, vector<16x8xf32>
    %cst_23 = arith.constant dense<0.000000e+00> : vector<8x2xf32>
    %72 = tpu.matmul %70, %69, %cst_23 {dimension_numbers = #tpu.dot_dimension_numbers<[1], [0], [0], [1], [0, 0, 1, 1], [], []>} : vector<8x16xf32>, vector<16x2xf32>, vector<8x2xf32> -> vector<8x2xf32>
    %cst_24 = arith.constant dense<0.000000e+00> : vector<16x2xf32>
    %73 = tpu.matmul %71, %72, %cst_24 {dimension_numbers = #tpu.dot_dimension_numbers<[1], [0], [0], [1], [0, 0, 1, 1], [], []>} : vector<16x8xf32>, vector<8x2xf32>, vector<16x2xf32> -> vector<16x2xf32>
    %74 = tpu.reciprocal %73 {approx = true} : vector<16x2xf32> -> vector<16x2xf32>
    %75 = arith.mulf %69, %74 : vector<16x2xf32>
    %cst_25 = arith.constant dense<0.000000e+00> : vector<16xf32>
    %76 = vector.multi_reduction <add>, %75, %cst_25 [1] : vector<16x2xf32> to vector<16xf32>
    %77 = vector.shape_cast %76 : vector<16xf32> to vector<16x1xf32>
    %cst_26 = arith.constant 5.000000e-01 : f32
    %78 = vector.broadcast %cst_26 : f32 to vector<16x1xf32>
    %79 = arith.mulf %77, %78 : vector<16x1xf32>
    %80 = vector.broadcast %79 : vector<16x1xf32> to vector<16x32xf32>
    %81 = arith.mulf %1, %80 : vector<16x32xf32>
    %cst_27 = arith.constant dense<0.000000e+00> : vector<8x32xf32>
    %82 = tpu.matmul %70, %81, %cst_27 {dimension_numbers = #tpu.dot_dimension_numbers<[1], [0], [0], [1], [0, 0, 1, 1], [], []>} : vector<8x16xf32>, vector<16x32xf32>, vector<8x32xf32> -> vector<8x32xf32>
    %c224 = arith.constant 224 : index
    %c0_28 = arith.constant 0 : index
    %83 = vector.load %arg1[%c224, %c0_28] : memref<416x128xf32, #tpu.memory_space<vmem>>, vector<32x32xf32>
    %84 = vector.extract_strided_slice %5 {offsets = [4, 0], sizes = [1, 32], strides = [1, 1]} : vector<8x128xf32> to vector<1x32xf32>
    %cst_29 = arith.constant dense<0.000000e+00> : vector<8x32xf32>
    %85 = tpu.matmul %4, %83, %cst_29 {dimension_numbers = #tpu.dot_dimension_numbers<[1], [0], [0], [1], [0, 0, 1, 1], [], []>} : vector<8x32xf32>, vector<32x32xf32>, vector<8x32xf32> -> vector<8x32xf32>
    %86 = vector.broadcast %84 : vector<1x32xf32> to vector<8x32xf32>
    %87 = arith.addf %85, %86 : vector<8x32xf32>
    %88 = math.tanh %87 : vector<8x32xf32>
    %c256 = arith.constant 256 : index
    %c0_30 = arith.constant 0 : index
    %89 = vector.load %arg1[%c256, %c0_30] : memref<416x128xf32, #tpu.memory_space<vmem>>, vector<32x32xf32>
    %c288 = arith.constant 288 : index
    %c0_31 = arith.constant 0 : index
    %90 = vector.load %arg1[%c288, %c0_31] : memref<416x128xf32, #tpu.memory_space<vmem>>, vector<32x32xf32>
    %91 = vector.extract_strided_slice %5 {offsets = [5, 0], sizes = [1, 32], strides = [1, 1]} : vector<8x128xf32> to vector<1x32xf32>
    %cst_32 = arith.constant dense<0.000000e+00> : vector<8x32xf32>
    %92 = tpu.matmul %82, %89, %cst_32 {dimension_numbers = #tpu.dot_dimension_numbers<[1], [0], [0], [1], [0, 0, 1, 1], [], []>} : vector<8x32xf32>, vector<32x32xf32>, vector<8x32xf32> -> vector<8x32xf32>
    %cst_33 = arith.constant dense<0.000000e+00> : vector<8x32xf32>
    %93 = tpu.matmul %88, %90, %cst_33 {dimension_numbers = #tpu.dot_dimension_numbers<[1], [0], [0], [1], [0, 0, 1, 1], [], []>} : vector<8x32xf32>, vector<32x32xf32>, vector<8x32xf32> -> vector<8x32xf32>
    %94 = arith.addf %92, %93 : vector<8x32xf32>
    %95 = vector.broadcast %91 : vector<1x32xf32> to vector<8x32xf32>
    %96 = arith.addf %94, %95 : vector<8x32xf32>
    %cst_34 = arith.constant 0.000000e+00 : f32
    %97 = vector.broadcast %cst_34 : f32 to vector<8x32xf32>
    %98 = arith.maximumf %96, %97 : vector<8x32xf32>
    %c320 = arith.constant 320 : index
    %c0_35 = arith.constant 0 : index
    %99 = vector.load %arg1[%c320, %c0_35] : memref<416x128xf32, #tpu.memory_space<vmem>>, vector<32x32xf32>
    %100 = vector.extract_strided_slice %5 {offsets = [6, 0], sizes = [1, 32], strides = [1, 1]} : vector<8x128xf32> to vector<1x32xf32>
    %cst_36 = arith.constant dense<0.000000e+00> : vector<8x32xf32>
    %101 = tpu.matmul %98, %99, %cst_36 {dimension_numbers = #tpu.dot_dimension_numbers<[1], [0], [0], [1], [0, 0, 1, 1], [], []>} : vector<8x32xf32>, vector<32x32xf32>, vector<8x32xf32> -> vector<8x32xf32>
    %102 = vector.broadcast %100 : vector<1x32xf32> to vector<8x32xf32>
    %103 = arith.addf %101, %102 : vector<8x32xf32>
    %cst_37 = arith.constant 0.000000e+00 : f32
    %104 = vector.broadcast %cst_37 : f32 to vector<8x32xf32>
    %105 = arith.maximumf %103, %104 : vector<8x32xf32>
    %c352 = arith.constant 352 : index
    %c0_38 = arith.constant 0 : index
    %106 = vector.load %arg1[%c352, %c0_38] : memref<416x128xf32, #tpu.memory_space<vmem>>, vector<32x128xf32>
    %107 = vector.extract_strided_slice %5 {offsets = [7, 0], sizes = [1, 128], strides = [1, 1]} : vector<8x128xf32> to vector<1x128xf32>
    %cst_39 = arith.constant dense<0.000000e+00> : vector<8x128xf32>
    %108 = tpu.matmul %105, %106, %cst_39 {dimension_numbers = #tpu.dot_dimension_numbers<[1], [0], [0], [1], [0, 0, 1, 1], [], []>} : vector<8x32xf32>, vector<32x128xf32>, vector<8x128xf32> -> vector<8x128xf32>
    %109 = vector.broadcast %107 : vector<1x128xf32> to vector<8x128xf32>
    %110 = arith.addf %108, %109 : vector<8x128xf32>
    %c0_40 = arith.constant 0 : index
    %c0_41 = arith.constant 0 : index
    %111 = vector.load %arg2[%c0_40, %c0_41] : memref<8x128xf32, #tpu.memory_space<vmem>>, vector<8x128xf32>
    tpu.vector_store %arg2[%c0_40, %c0_41], %110 {strides = array<i32>} : memref<8x128xf32, #tpu.memory_space<vmem>>, vector<8x128xf32>,
    return
  }
}

</mosaic_0001>

<llo_original>
// kernel: _forward_impl.1
$region0: #{_forward_impl.1}
  #allocation0 [shape = 'u32[]', space=smem, size = 0x4, offset = 0x4, fixed_abs, tag = 'smem constant byte address 0x4 - core index']
  #allocation1 [shape = 'u32[72,128]{1,0:T(1,128)}', space=vmem, size = 0x9000, scoped, tag = 'internal scratch']
  %s0 = inlined_call_operand.vmem [shape: f32[24,128], index: 0, kind: input, shape index: {}]
  %s1 = inlined_call_operand.vmem [shape: f32[416,128], index: 1, kind: input, shape index: {}]
  %s2 = inlined_call_operand.vmem [shape: f32[8,128], index: 2, kind: output, shape index: {}]
  %s3 = sld [smem:[#allocation0]]
  $region18: #{_forward_impl.1} parent=0
    _
  %s5 = ssub.s32 1, %s3
  %s6 = scalar_select 0, %s5, %s3
  // Predicated region
  $region2: #{_forward_impl.1} parent=0 // pred_check
    _
  $region3: #{_forward_impl.1} parent=0 // pred_check_branch
    %8 = sbr.rel (0) target = $region5
  $region4: #{_forward_impl.1} parent=0 // pred_region
    _
  $region5: #{_forward_impl.1} parent=0 // pred_fallthru
    _
  // Predicated region
  $region6: #{_forward_impl.1} parent=0 // pred_check
    _
  $region7: #{_forward_impl.1} parent=0 // pred_check_branch
    %10 = sbr.rel (0) target = $region9
  $region8: #{_forward_impl.1} parent=0 // pred_region
    _
  $region9: #{_forward_impl.1} parent=0 // pred_fallthru
    _
  %v11 = vld [vmem:[%s0] sm:$0xff]
  %v12 = vld [vmem:[%s0 + $0x8] sm:$0xff]
  %v13 = vld [vmem:[%s0 + $0x10] sm:$0xff]
  %v14 = vld [vmem:[%s1 + $0x198] sm:$0xff]
  %v15 = vld [vmem:[%s1] sm:$0xff]
  %v16 = vld [vmem:[%s1 + $0x8] sm:$0xff]
  %v17 = vld [vmem:[%s1 + $0x10] sm:$0xff]
  %v18 = vld [vmem:[%s1 + $0x18] sm:$0xff]
  %v19 = vperm.slane %v14, 0
  %22 = vrot.lane.b32.xlu0 %v11, 96
  %v23 = vpop.permute.xlu0 %22
  %24 = vrot.lane.b32.xlu0 %v12, 96
  %v25 = vpop.permute.xlu0 %24
  %vm26 = vcmask 261120
  %v27 = vsel %vm26, %v23, 0
  %v29 = vsel %vm26, %v25, 0
  %31 = vmatpush.msra.mxu0 0.0
  %32 = vmatpush.msra.mxu0 0.0
  %33 = vmatpush.msra.mxu0 0.0
  %34 = vmatpush.msra.mxu0 0.0
  %35 = vmatpush.msra.mxu0 0.0
  %36 = vmatpush.msra.mxu0 0.0
  %37 = vmatpush.msra.mxu0 0.0
  %38 = vmatpush.msra.mxu0 0.0
  %39 = vmatpush.msra.mxu0 0.0
  %40 = vmatpush.msra.mxu0 0.0
  %41 = vmatpush.msra.mxu0 0.0
  %42 = vmatpush.msra.mxu0 0.0
  %43 = vmatpush.msra.mxu0 %v18
  %44 = vmatpush.msra.mxu0 %v17
  %45 = vmatpush.msra.mxu0 %v16
  %46 = vmatpush.msra.mxu0 %v15
  %47 = vmatmul.f32.gmra.mxu0 %v27
  %v48 = vpop.f32.mrf.mxu0
  %v49 = vadd.f32 %v19, %v48
  %50 = vmatmul.f32.gmra.mxu0 %v29
  %v51 = vpop.f32.mrf.mxu0
  %v52 = vadd.f32 %v19, %v51
  %53 = vdwg.mxu0
  %v54 = vxor.u32 %v49, 2147483648
  %v55 = vxor.u32 %v52, 2147483648
  %v56 = vmul.f32 %v54, 1.442695
  %v57 = vpow.pop %v56
  %v58 = vmul.f32 %v55, 1.442695
  %v59 = vpow.pop %v58
  %v60 = vadd.f32 %v57, 1.0
  %v61 = vadd.f32 %v59, 1.0
  %v62 = vrcp.pop %v60
  %v63 = vmul.f32 %v60, %v62
  %v64 = vsub.f32 1.0, %v63
  %v65 = vmul.f32 %v62, %v64
  %v66 = vadd.f32 %v62, %v65
  %vm67 = vweird.f32 %v60
  %vm68 = vweird.f32 %v62
  %vm69 = vmor %vm67, %vm68
  %v70 = vsel %vm69, %v62, %v66
  %v71 = vand.u32 2147483647, %v60
  %vm72 = vcmp.eq.f32.partialorder %v71, 8.507059e+37
  %v73 = vand.u32 %v60, 2147483648
  %v74 = vor.u32 1.1754944e-38, %v73
  %v75 = vsel %vm72, %v74, %v70
  %v76 = vmul.f32 1.0, %v75
  %v77 = vrcp.pop %v61
  %v78 = vmul.f32 %v61, %v77
  %v79 = vsub.f32 1.0, %v78
  %v80 = vmul.f32 %v77, %v79
  %v81 = vadd.f32 %v77, %v80
  %vm82 = vweird.f32 %v61
  %vm83 = vweird.f32 %v77
  %vm84 = vmor %vm82, %vm83
  %v85 = vsel %vm84, %v77, %v81
  %v86 = vand.u32 2147483647, %v61
  %vm87 = vcmp.eq.f32.partialorder %v86, 8.507059e+37
  %v88 = vand.u32 %v61, 2147483648
  %v89 = vor.u32 1.1754944e-38, %v88
  %v90 = vsel %vm87, %v89, %v85
  %v91 = vmul.f32 1.0, %v90
  %v92 = vmax.f32 %v49, 0.0
  %v93 = vmax.f32 %v52, 0.0
  %96 = vrot.lane.b32.xlu0 %v92, 96
  %v97 = vpop.permute.xlu0 %96
  %98 = vrot.lane.b32.xlu0 %v93, 96
  %v99 = vpop.permute.xlu0 %98
  %v102 = vmul.f32 %v76, %v97
  %v103 = vmul.f32 %v91, %v99
  %v104 = vsub.f32 1.0, %v76
  %v105 = vsub.f32 1.0, %v91
  %v108 = vmul.f32 %v104, %v23
  %v109 = vmul.f32 %v105, %v25
  %v110 = vadd.f32 %v102, %v108
  %v111 = vadd.f32 %v103, %v109
  %v112 = vld [vmem:[%s1 + $0x20] sm:$0xff]
  %v113 = vld [vmem:[%s1 + $0x28] sm:$0xff]
  %v114 = vld [vmem:[%s1 + $0x30] sm:$0xff]
  %v115 = vld [vmem:[%s1 + $0x38] sm:$0xff]
  %v116 = vperm.slane %v14, 1
  %v118 = vsel %vm26, %v110, 0
  %v121 = vsel %vm26, %v111, 0
  %123 = vmatpush.msra.mxu0 0.0
  %124 = vmatpush.msra.mxu0 0.0
  %125 = vmatpush.msra.mxu0 0.0
  %126 = vmatpush.msra.mxu0 0.0
  %127 = vmatpush.msra.mxu0 0.0
  %128 = vmatpush.msra.mxu0 0.0
  %129 = vmatpush.msra.mxu0 0.0
  %130 = vmatpush.msra.mxu0 0.0
  %131 = vmatpush.msra.mxu0 0.0
  %132 = vmatpush.msra.mxu0 0.0
  %133 = vmatpush.msra.mxu0 0.0
  %134 = vmatpush.msra.mxu0 0.0
  %135 = vmatpush.msra.mxu0 %v115
  %136 = vmatpush.msra.mxu0 %v114
  %137 = vmatpush.msra.mxu0 %v113
  %138 = vmatpush.msra.mxu0 %v112
  %139 = vmatmul.f32.gmra.mxu0 %v118
  %v140 = vpop.f32.mrf.mxu0
  %v141 = vadd.f32 %v116, %v140
  %142 = vmatmul.f32.gmra.mxu0 %v121
  %v143 = vpop.f32.mrf.mxu0
  %v144 = vadd.f32 %v116, %v143
  %145 = vdwg.mxu0
  %v146 = vxor.u32 %v141, 2147483648
  %v147 = vxor.u32 %v144, 2147483648
  %v148 = vmul.f32 %v146, 1.442695
  %v149 = vpow.pop %v148
  %v150 = vmul.f32 %v147, 1.442695
  %v151 = vpow.pop %v150
  %v152 = vadd.f32 %v149, 1.0
  %v153 = vadd.f32 %v151, 1.0
  %v154 = vrcp.pop %v152
  %v155 = vmul.f32 %v152, %v154
  %v156 = vsub.f32 1.0, %v155
  %v157 = vmul.f32 %v154, %v156
  %v158 = vadd.f32 %v154, %v157
  %vm159 = vweird.f32 %v152
  %vm160 = vweird.f32 %v154
  %vm161 = vmor %vm159, %vm160
  %v162 = vsel %vm161, %v154, %v158
  %v163 = vand.u32 2147483647, %v152
  %vm164 = vcmp.eq.f32.partialorder %v163, 8.507059e+37
  %v165 = vand.u32 %v152, 2147483648
  %v166 = vor.u32 1.1754944e-38, %v165
  %v167 = vsel %vm164, %v166, %v162
  %v168 = vmul.f32 1.0, %v167
  %v169 = vrcp.pop %v153
  %v170 = vmul.f32 %v153, %v169
  %v171 = vsub.f32 1.0, %v170
  %v172 = vmul.f32 %v169, %v171
  %v173 = vadd.f32 %v169, %v172
  %vm174 = vweird.f32 %v153
  %vm175 = vweird.f32 %v169
  %vm176 = vmor %vm174, %vm175
  %v177 = vsel %vm176, %v169, %v173
  %v178 = vand.u32 2147483647, %v153
  %vm179 = vcmp.eq.f32.partialorder %v178, 8.507059e+37
  %v180 = vand.u32 %v153, 2147483648
  %v181 = vor.u32 1.1754944e-38, %v180
  %v182 = vsel %vm179, %v181, %v177
  %v183 = vmul.f32 1.0, %v182
  %v184 = vmax.f32 %v141, 0.0
  %v185 = vmax.f32 %v144, 0.0
  %188 = vrot.lane.b32.xlu0 %v184, 96
  %v189 = vpop.permute.xlu0 %188
  %190 = vrot.lane.b32.xlu0 %v185, 96
  %v191 = vpop.permute.xlu0 %190
  %v194 = vmul.f32 %v168, %v189
  %v195 = vmul.f32 %v183, %v191
  %v196 = vsub.f32 1.0, %v168
  %v197 = vsub.f32 1.0, %v183
  %v198 = vmul.f32 %v196, %v110
  %v199 = vmul.f32 %v197, %v111
  %v200 = vadd.f32 %v194, %v198
  %v201 = vadd.f32 %v195, %v199
  %v202 = vld [vmem:[%s1 + $0x40] sm:$0xff]
  %v203 = vld [vmem:[%s1 + $0x48] sm:$0xff]
  %v204 = vld [vmem:[%s1 + $0x50] sm:$0xff]
  %v205 = vld [vmem:[%s1 + $0x58] sm:$0xff]
  %v206 = vperm.slane %v14, 2
  %v208 = vsel %vm26, %v200, 0
  %v211 = vsel %vm26, %v201, 0
  %213 = vmatpush.msra.mxu0 0.0
  %214 = vmatpush.msra.mxu0 0.0
  %215 = vmatpush.msra.mxu0 0.0
  %216 = vmatpush.msra.mxu0 0.0
  %217 = vmatpush.msra.mxu0 0.0
  %218 = vmatpush.msra.mxu0 0.0
  %219 = vmatpush.msra.mxu0 0.0
  %220 = vmatpush.msra.mxu0 0.0
  %221 = vmatpush.msra.mxu0 0.0
  %222 = vmatpush.msra.mxu0 0.0
  %223 = vmatpush.msra.mxu0 0.0
  %224 = vmatpush.msra.mxu0 0.0
  %225 = vmatpush.msra.mxu0 %v205
  %226 = vmatpush.msra.mxu0 %v204
  %227 = vmatpush.msra.mxu0 %v203
  %228 = vmatpush.msra.mxu0 %v202
  %229 = vmatmul.f32.gmra.mxu0 %v208
  %v230 = vpop.f32.mrf.mxu0
  %v231 = vadd.f32 %v206, %v230
  %232 = vmatmul.f32.gmra.mxu0 %v211
  %v233 = vpop.f32.mrf.mxu0
  %v234 = vadd.f32 %v206, %v233
  %235 = vdwg.mxu0
  %v236 = vmax.f32 %v231, 0.0
  %v237 = vmax.f32 %v234, 0.0
  %v238 = vld [vmem:[%s1 + $0x60] sm:$0xff]
  %v239 = vld [vmem:[%s1 + $0x68] sm:$0xff]
  %v240 = vld [vmem:[%s1 + $0x70] sm:$0xff]
  %v241 = vld [vmem:[%s1 + $0x78] sm:$0xff]
  %v242 = vld [vmem:[%s1 + $0x80] sm:$0xff]
  %v243 = vld [vmem:[%s1 + $0x88] sm:$0xff]
  %v244 = vld [vmem:[%s1 + $0x90] sm:$0xff]
  %v245 = vld [vmem:[%s1 + $0x98] sm:$0xff]
  %v246 = vld [vmem:[%s1 + $0xa0] sm:$0xff]
  %v247 = vld [vmem:[%s1 + $0xa8] sm:$0xff]
  %v248 = vld [vmem:[%s1 + $0xb0] sm:$0xff]
  %v249 = vld [vmem:[%s1 + $0xb8] sm:$0xff]
  %v250 = vld [vmem:[%s1 + $0xc0] sm:$0xff]
  %v251 = vld [vmem:[%s1 + $0xc8] sm:$0xff]
  %v252 = vld [vmem:[%s1 + $0xd0] sm:$0xff]
  %v253 = vld [vmem:[%s1 + $0xd8] sm:$0xff]
  %254 = vmatpush.msra.mxu0 %v253
  %255 = vmatpush.msra.mxu0 %v252
  %256 = vmatpush.msra.mxu0 %v251
  %257 = vmatpush.msra.mxu0 %v250
  %258 = vmatpush.msra.mxu0 %v249
  %259 = vmatpush.msra.mxu0 %v248
  %260 = vmatpush.msra.mxu0 %v247
  %261 = vmatpush.msra.mxu0 %v246
  %262 = vmatpush.msra.mxu0 %v245
  %263 = vmatpush.msra.mxu0 %v244
  %264 = vmatpush.msra.mxu0 %v243
  %265 = vmatpush.msra.mxu0 %v242
  %266 = vmatpush.msra.mxu0 %v241
  %267 = vmatpush.msra.mxu0 %v240
  %268 = vmatpush.msra.mxu0 %v239
  %269 = vmatpush.msra.mxu0 %v238
  %270 = vmatmul.f32.gmra.mxu0 %v236
  %v271 = vpop.f32.mrf.mxu0
  %v272 = vadd.f32 0.0, %v271
  %273 = vmatmul.f32.gmra.mxu0 %v237
  %v274 = vpop.f32.mrf.mxu0
  %v275 = vadd.f32 0.0, %v274
  %276 = vdwg.mxu0
  %v277 = vperm.slane %v14, 3
  %v278 = vadd.f32 %v272, %v277
  %v279 = vadd.f32 %v275, %v277
  %280 = vset.pattern.permute.xlu0 64
  %281 = vperm.xlu0 %280, %v11
  %v282 = vpop.permute.xlu0 %281
  %284 = vset.pattern.permute.xlu0 64
  %285 = vperm.xlu0 %284, %v12
  %v286 = vpop.permute.xlu0 %285
  %v288 = vmul.f32 %v278, %v282
  %v289 = vmul.f32 %v279, %v286
  %v290 = vsub.f32 1.0, %v11
  %v291 = vsub.f32 1.0, %v12
  %v292 = vmul.f32 %v290, -1e+30
  %v293 = vmul.f32 %v291, -1e+30
  %295 = vset.pattern.permute.xlu0 64
  %296 = vperm.xlu0 %295, %v292
  %v297 = vpop.permute.xlu0 %296
  %300 = vset.pattern.permute.xlu0 64
  %301 = vperm.xlu0 %300, %v293
  %v302 = vpop.permute.xlu0 %301
  %v304 = vadd.f32 %v288, %v297
  %v305 = vadd.f32 %v289, %v302
  %vm306 = vcmask 15360
  %v307 = vsel %vm306, %v304, -inf
  %v308 = vsel %vm306, %v305, -inf
  %v309 = vmax.f32 %v307, %v308
  %v310 = vrot.slane %v309, 4
  %v311 = vmax.f32 %v309, %v310
  %v312 = vrot.slane %v311, 2
  %v313 = vmax.f32 %v311, %v312
  %v314 = vrot.slane %v313, 1
  %v315 = vmax.f32 %v313, %v314
  %v316 = vsub.f32 %v304, %v315
  %v317 = vsub.f32 %v305, %v315
  %v318 = vmul.f32 %v316, 1.442695
  %v319 = vpow.pop %v318
  %v320 = vmul.f32 %v317, 1.442695
  %v321 = vpow.pop %v320
  %v322 = vld [vmem:[%s1 + $0x180] sm:$0xff]
  %v323 = vld [vmem:[%s1 + $0x188] sm:$0xff]
  %v324 = vld [vmem:[%s1 + $0x190] sm:$0xff]
  %vm325 = vcmask 130048
  %v327 = vsel %vm325, %v322, 0
  %329 = vmatpush.msra.mxu0 0.0
  %330 = vmatpush.msra.mxu0 0.0
  %331 = vmatpush.msra.mxu0 0.0
  %332 = vmatpush.msra.mxu0 0.0
  %333 = vmatpush.msra.mxu0 0.0
  %334 = vmatpush.msra.mxu0 0.0
  %335 = vmatpush.msra.mxu0 0.0
  %336 = vmatpush.msra.mxu0 0.0
  %337 = vmatpush.msra.mxu0 0.0
  %338 = vmatpush.msra.mxu0 0.0
  %339 = vmatpush.msra.mxu0 0.0
  %340 = vmatpush.msra.mxu0 0.0
  %341 = vmatpush.msra.mxu0 0.0
  %342 = vmatpush.msra.mxu0 0.0
  %343 = vmatpush.msra.mxu0 %v321
  %344 = vmatpush.msra.mxu0 %v319
  %345 = vmatmul.f32.gmra.mxu0 %v327
  %v346 = vpop.f32.mrf.mxu0
  %v347 = vadd.f32 0.0, %v346
  %348 = vdwg.mxu0
  %vm349 = vcmask 64512
  %v351 = vsel %vm349, %v323, 0
  %v354 = vsel %vm349, %v324, 0
  %356 = vmatpush.msra.mxu0 0.0
  %357 = vmatpush.msra.mxu0 0.0
  %358 = vmatpush.msra.mxu0 0.0
  %359 = vmatpush.msra.mxu0 0.0
  %360 = vmatpush.msra.mxu0 0.0
  %361 = vmatpush.msra.mxu0 0.0
  %362 = vmatpush.msra.mxu0 0.0
  %363 = vmatpush.msra.mxu0 0.0
  %364 = vmatpush.msra.mxu0 0.0
  %365 = vmatpush.msra.mxu0 0.0
  %366 = vmatpush.msra.mxu0 0.0
  %367 = vmatpush.msra.mxu0 0.0
  %368 = vmatpush.msra.mxu0 0.0
  %369 = vmatpush.msra.mxu0 0.0
  %370 = vmatpush.msra.mxu0 0.0
  %371 = vmatpush.msra.mxu0 %v347
  %372 = vmatmul.f32.gmra.mxu0 %v351
  %v373 = vpop.f32.mrf.mxu0
  %v374 = vadd.f32 0.0, %v373
  %375 = vmatmul.f32.gmra.mxu0 %v354
  %v376 = vpop.f32.mrf.mxu0
  %v377 = vadd.f32 0.0, %v376
  %378 = vdwg.mxu0
  %v379 = vrcp.pop %v374
  %v380 = vrcp.pop %v377
  %v381 = vmul.f32 %v319, %v379
  %v382 = vmul.f32 %v321, %v380
  %v383 = vsel %vm306, %v381, 0.0
  %384 = vadd.xlane.f32.xlu0 %v383
  %v385 = vpop.xlane.xlu0 %384
  %v386 = vsel %vm306, %v382, 0.0
  %387 = vadd.xlane.f32.xlu0 %v386
  %v388 = vpop.xlane.xlu0 %387
  %v389 = vmul.f32 %v385, 0.5
  %v390 = vmul.f32 %v388, 0.5
  %v391 = vmul.f32 %v11, %v389
  %v392 = vmul.f32 %v12, %v390
  %393 = vmatpush.msra.mxu0 0.0
  %394 = vmatpush.msra.mxu0 0.0
  %395 = vmatpush.msra.mxu0 0.0
  %396 = vmatpush.msra.mxu0 0.0
  %397 = vmatpush.msra.mxu0 0.0
  %398 = vmatpush.msra.mxu0 0.0
  %399 = vmatpush.msra.mxu0 0.0
  %400 = vmatpush.msra.mxu0 0.0
  %401 = vmatpush.msra.mxu0 0.0
  %402 = vmatpush.msra.mxu0 0.0
  %403 = vmatpush.msra.mxu0 0.0
  %404 = vmatpush.msra.mxu0 0.0
  %405 = vmatpush.msra.mxu0 0.0
  %406 = vmatpush.msra.mxu0 0.0
  %407 = vmatpush.msra.mxu0 %v392
  %408 = vmatpush.msra.mxu0 %v391
  %409 = vmatmul.f32.gmra.mxu0 %v327
  %v410 = vpop.f32.mrf.mxu0
  %v411 = vadd.f32 0.0, %v410
  %412 = vdwg.mxu0
  %v413 = vld [vmem:[%s1 + $0xe0] sm:$0xff]
  %v414 = vld [vmem:[%s1 + $0xe8] sm:$0xff]
  %v415 = vld [vmem:[%s1 + $0xf0] sm:$0xff]
  %v416 = vld [vmem:[%s1 + $0xf8] sm:$0xff]
  %v417 = vperm.slane %v14, 4
  %v419 = vsel %vm26, %v13, 0
  %421 = vmatpush.msra.mxu0 0.0
  %422 = vmatpush.msra.mxu0 0.0
  %423 = vmatpush.msra.mxu0 0.0
  %424 = vmatpush.msra.mxu0 0.0
  %425 = vmatpush.msra.mxu0 0.0
  %426 = vmatpush.msra.mxu0 0.0
  %427 = vmatpush.msra.mxu0 0.0
  %428 = vmatpush.msra.mxu0 0.0
  %429 = vmatpush.msra.mxu0 0.0
  %430 = vmatpush.msra.mxu0 0.0
  %431 = vmatpush.msra.mxu0 0.0
  %432 = vmatpush.msra.mxu0 0.0
  %433 = vmatpush.msra.mxu0 %v416
  %434 = vmatpush.msra.mxu0 %v415
  %435 = vmatpush.msra.mxu0 %v414
  %436 = vmatpush.msra.mxu0 %v413
  %437 = vmatmul.f32.gmra.mxu0 %v419
  %v438 = vpop.f32.mrf.mxu0
  %v439 = vadd.f32 %v417, %v438
  %440 = vdwg.mxu0
  %v441 = vtanh.pop %v439
  %v442 = vld [vmem:[%s1 + $0x100] sm:$0xff]
  %v443 = vld [vmem:[%s1 + $0x108] sm:$0xff]
  %v444 = vld [vmem:[%s1 + $0x110] sm:$0xff]
  %v445 = vld [vmem:[%s1 + $0x118] sm:$0xff]
  %v446 = vld [vmem:[%s1 + $0x120] sm:$0xff]
  %v447 = vld [vmem:[%s1 + $0x128] sm:$0xff]
  %v448 = vld [vmem:[%s1 + $0x130] sm:$0xff]
  %v449 = vld [vmem:[%s1 + $0x138] sm:$0xff]
  %v451 = vsel %vm26, %v441, 0
  %453 = vmatpush.msra.mxu0 0.0
  %454 = vmatpush.msra.mxu0 0.0
  %455 = vmatpush.msra.mxu0 0.0
  %456 = vmatpush.msra.mxu0 0.0
  %457 = vmatpush.msra.mxu0 0.0
  %458 = vmatpush.msra.mxu0 0.0
  %459 = vmatpush.msra.mxu0 0.0
  %460 = vmatpush.msra.mxu0 0.0
  %461 = vmatpush.msra.mxu0 0.0
  %462 = vmatpush.msra.mxu0 0.0
  %463 = vmatpush.msra.mxu0 0.0
  %464 = vmatpush.msra.mxu0 0.0
  %465 = vmatpush.msra.mxu0 %v449
  %466 = vmatpush.msra.mxu0 %v448
  %467 = vmatpush.msra.mxu0 %v447
  %468 = vmatpush.msra.mxu0 %v446
  %469 = vmatmul.f32.gmra.mxu0 %v451
  %v470 = vpop.f32.mrf.mxu0
  %v471 = vadd.f32 0.0, %v470
  %472 = vdwg.mxu0
  %v474 = vsel %vm26, %v411, 0
  %476 = vmatpush.msra.mxu0 0.0
  %477 = vmatpush.msra.mxu0 0.0
  %478 = vmatpush.msra.mxu0 0.0
  %479 = vmatpush.msra.mxu0 0.0
  %480 = vmatpush.msra.mxu0 0.0
  %481 = vmatpush.msra.mxu0 0.0
  %482 = vmatpush.msra.mxu0 0.0
  %483 = vmatpush.msra.mxu0 0.0
  %484 = vmatpush.msra.mxu0 0.0
  %485 = vmatpush.msra.mxu0 0.0
  %486 = vmatpush.msra.mxu0 0.0
  %487 = vmatpush.msra.mxu0 0.0
  %488 = vmatpush.msra.mxu0 %v445
  %489 = vmatpush.msra.mxu0 %v444
  %490 = vmatpush.msra.mxu0 %v443
  %491 = vmatpush.msra.mxu0 %v442
  %492 = vmatmul.f32.gmra.mxu0 %v474
  %v493 = vpop.f32.mrf.mxu0
  %v494 = vadd.f32 %v471, %v493
  %495 = vdwg.mxu0
  %v496 = vperm.slane %v14, 5
  %v497 = vadd.f32 %v494, %v496
  %v498 = vmax.f32 %v497, 0.0
  %v499 = vld [vmem:[%s1 + $0x140] sm:$0xff]
  %v500 = vld [vmem:[%s1 + $0x148] sm:$0xff]
  %v501 = vld [vmem:[%s1 + $0x150] sm:$0xff]
  %v502 = vld [vmem:[%s1 + $0x158] sm:$0xff]
  %v503 = vperm.slane %v14, 6
  %v505 = vsel %vm26, %v498, 0
  %507 = vmatpush.msra.mxu0 0.0
  %508 = vmatpush.msra.mxu0 0.0
  %509 = vmatpush.msra.mxu0 0.0
  %510 = vmatpush.msra.mxu0 0.0
  %511 = vmatpush.msra.mxu0 0.0
  %512 = vmatpush.msra.mxu0 0.0
  %513 = vmatpush.msra.mxu0 0.0
  %514 = vmatpush.msra.mxu0 0.0
  %515 = vmatpush.msra.mxu0 0.0
  %516 = vmatpush.msra.mxu0 0.0
  %517 = vmatpush.msra.mxu0 0.0
  %518 = vmatpush.msra.mxu0 0.0
  %519 = vmatpush.msra.mxu0 %v502
  %520 = vmatpush.msra.mxu0 %v501
  %521 = vmatpush.msra.mxu0 %v500
  %522 = vmatpush.msra.mxu0 %v499
  %523 = vmatmul.f32.gmra.mxu0 %v505
  %v524 = vpop.f32.mrf.mxu0
  %v525 = vadd.f32 %v503, %v524
  %526 = vdwg.mxu0
  %v527 = vmax.f32 %v525, 0.0
  %v528 = vld [vmem:[%s1 + $0x160] sm:$0xff]
  %v529 = vld [vmem:[%s1 + $0x168] sm:$0xff]
  %v530 = vld [vmem:[%s1 + $0x170] sm:$0xff]
  %v531 = vld [vmem:[%s1 + $0x178] sm:$0xff]
  %v532 = vperm.slane %v14, 7
  %v534 = vsel %vm26, %v527, 0
  %536 = vmatpush.msra.mxu0 0.0
  %537 = vmatpush.msra.mxu0 0.0
  %538 = vmatpush.msra.mxu0 0.0
  %539 = vmatpush.msra.mxu0 0.0
  %540 = vmatpush.msra.mxu0 0.0
  %541 = vmatpush.msra.mxu0 0.0
  %542 = vmatpush.msra.mxu0 0.0
  %543 = vmatpush.msra.mxu0 0.0
  %544 = vmatpush.msra.mxu0 0.0
  %545 = vmatpush.msra.mxu0 0.0
  %546 = vmatpush.msra.mxu0 0.0
  %547 = vmatpush.msra.mxu0 0.0
  %548 = vmatpush.msra.mxu0 %v531
  %549 = vmatpush.msra.mxu0 %v530
  %550 = vmatpush.msra.mxu0 %v529
  %551 = vmatpush.msra.mxu0 %v528
  %552 = vmatmul.f32.gmra.mxu0 %v534
  %v553 = vpop.f32.mrf.mxu0
  %v554 = vadd.f32 %v532, %v553
  %555 = vdwg.mxu0
  %556 = vst [vmem:[%s2] sm:$0xff] %v554
  // Predicated region
  $region10: #{_forward_impl.1} parent=0 // pred_check
    _
  $region11: #{_forward_impl.1} parent=0 // pred_check_branch
    %558 = sbr.rel (0) target = $region13
  $region12: #{_forward_impl.1} parent=0 // pred_region
    _
  $region13: #{_forward_impl.1} parent=0 // pred_fallthru
    _
  // Predicated region
  $region14: #{_forward_impl.1} parent=0 // pred_check
    _
  $region15: #{_forward_impl.1} parent=0 // pred_check_branch
    %560 = sbr.rel (0) target = $region17
  $region16: #{_forward_impl.1} parent=0 // pred_region
    _
  $region17: #{_forward_impl.1} parent=0 // pred_fallthru
    _

</llo_original>
